<compile_context>
chip_gen: v7x
topology: tpu7x:2x2x1
jax: 0.10.0
libtpu: 0.0.40
codegen_flags: <defaults>
</compile_context>

<pallas_src>
import numpy as np
import jax
import jax.numpy as jnp
from jax import lax
from jax.experimental import pallas as pl
from jax.experimental.pallas import tpu as pltpu

H_IN = 50                      # input "height"; conv5 output is 10*6 features
# (C_in, C_out, kH, stride_H, H_in, H_out) for the five conv blocks
LAYER_CFG = (
    (1, 2, 2, 2, 50, 25),
    (2, 3, 3, 2, 25, 12),
    (3, 5, 2, 2, 12, 6),
    (5, 10, 1, 1, 6, 6),
    (10, 10, 1, 1, 6, 6),
)
FEAT = 10 * 6
NUM_CLASSES = 2
BN_EPS = 1e-5


def _round_up(x, m):
    return (x + m - 1) // m * m


ROWS = tuple(cfg[1] * cfg[5] for cfg in LAYER_CFG)        # (50, 36, 30, 60, 60)
ROWS_PAD = tuple(_round_up(r, 8) for r in ROWS)           # (56, 40, 32, 64, 64)
_bias_off, _o = [], 0
for _r in ROWS_PAD:
    _bias_off.append(_o)
    _o += _r
BIAS_OFF = tuple(_bias_off)                                # (0, 56, 96, 128, 192)
LIN_BIAS_OFF = _o                                          # 256
FEAT_PAD = ROWS_PAD[-1]                                    # 64
BIAS_ROWS = _round_up(LIN_BIAS_OFF + NUM_CLASSES, 8)       # 264


# ----------------------------- Pallas kernel --------------------------------
def iegm_kernel(x_ref, w1_ref, w2_ref, w3_ref, w4_ref, w5_ref,
                wl_ref, b_ref, out_ref):
    # x_ref: (BT, 50) raw input block, samples on the sublane axis of the input
    # but on the LANE axis of every activation below.
    b_all = b_ref[...]                                    # (264, 1) f32, resident

    # Layer 1: W1 @ X^T — the input transpose is folded into the contraction
    # (both operands contract over their last axis), operands in bf16.
    z = lax.dot_general(
        w1_ref[...], x_ref[...].astype(jnp.bfloat16),
        dimension_numbers=(((1,), (1,)), ((), ())),
        preferred_element_type=jnp.float32)               # (ROWS_PAD[0], BT)
    a = jnp.maximum(z + b_all[BIAS_OFF[0]:BIAS_OFF[0] + ROWS_PAD[0]], 0.0)

    # Layers 2..5: folded conv (+ previous BatchNorm) as one bf16 matmul each,
    # bias + ReLU in f32.  Weights are packed (rows_out, rows_in) so they feed
    # the MXU directly without per-step relayout.
    for idx, w_ref in ((1, w2_ref), (2, w3_ref), (3, w4_ref), (4, w5_ref)):
        z = jnp.dot(w_ref[...], a.astype(jnp.bfloat16),
                    preferred_element_type=jnp.float32)
        a = jnp.maximum(z + b_all[BIAS_OFF[idx]:BIAS_OFF[idx] + ROWS_PAD[idx]], 0.0)

    # Final Linear (2 rows, last BatchNorm folded in): broadcast-multiply +
    # cross-sublane sum on the VPU/XLU instead of a <1%-utilized MXU pass.
    wl = wl_ref[...]                                       # (FEAT_PAD, 2) f32
    r0 = jnp.sum(a * wl[:, 0:1], axis=0, keepdims=True)    # (1, BT)
    r1 = jnp.sum(a * wl[:, 1:2], axis=0, keepdims=True)    # (1, BT)
    out_ref[0:1, :] = r0 + b_all[LIN_BIAS_OFF:LIN_BIAS_OFF + 1]
    out_ref[1:2, :] = r1 + b_all[LIN_BIAS_OFF + 1:LIN_BIAS_OFF + 2]


# ------------------------------ host wrapper --------------------------------
def iegm_forward(x_nchw, packed_params, *, bt=4096):
    n = int(x_nchw.shape[0])
    # (N, 1, 50, 1) -> (N, 50): a free reshape — no host transpose, no host pad.
    x = x_nchw.reshape(n, H_IN).astype(jnp.float32)

    n_ru = _round_up(max(n, 1), 128)
    bt = max(128, min(int(bt), n_ru))
    # v7x megacore: if the whole batch would be a single grid step, split it in
    # two so both TensorCores get work (no-op for tiny batches < 256).
    if bt == n_ru and n_ru >= 256:
        bt = _round_up(n_ru // 2, 128)
    grid = pl.cdiv(n, bt)

    # Explicit VMEM budget: double-buffered input/output blocks + live f32/bf16
    # activations + resident weights.  Default bt<=8192 stays well under v7x's
    # 64 MiB per-TensorCore VMEM; v5e/v6e (128 MiB) have plenty of headroom.
    est = 4 * bt * (2 * H_IN + 2 * NUM_CLASSES + 16 * FEAT_PAD) + (4 << 20)
    vmem_limit = int(min(max(est, 32 << 20), 56 << 20))

    in_specs = [pl.BlockSpec((bt, H_IN), lambda i: (i, 0))]
    in_specs += [pl.BlockSpec(p.shape, lambda i: (0, 0)) for p in packed_params]
    out_specs = pl.BlockSpec((NUM_CLASSES, bt), lambda i: (0, i))

    out = pl.pallas_call(
        iegm_kernel,
        out_shape=jax.ShapeDtypeStruct((NUM_CLASSES, n), jnp.float32),
        grid=(grid,),
        in_specs=in_specs,
        out_specs=out_specs,
        compiler_params=pltpu.CompilerParams(
            dimension_semantics=("parallel",),       # batch tiles are independent
            vmem_limit_bytes=vmem_limit),
    )(x, *packed_params)
    return jnp.transpose(out)                        # (N, 2) — tiny logits transpose


# ------------------------- deterministic parameters -------------------------
def init_raw_params(key):
    keys = jax.random.split(key, 32)
    ki = iter(keys)
    conv = []
    for (cin, cout, k, s, hin, hout) in LAYER_CFG:
        w = 0.3 * jax.random.normal(next(ki), (cout, cin, k), jnp.float32)
        b = 0.1 * jax.random.normal(next(ki), (cout,), jnp.float32)
        gamma = 1.0 + 0.1 * jax.random.normal(next(ki), (cout,), jnp.float32)
        beta = 0.1 * jax.random.normal(next(ki), (cout,), jnp.float32)
        rmean = 0.05 * jax.random.normal(next(ki), (cout,), jnp.float32)
        rvar = 1.0 + 0.2 * jax.random.uniform(next(ki), (cout,), jnp.float32)
        conv.append((w, b, gamma, beta, rmean, rvar))
    wl = 0.2 * jax.random.normal(next(ki), (NUM_CLASSES, FEAT), jnp.float32)
    bl = 0.1 * jax.random.normal(next(ki), (NUM_CLASSES,), jnp.float32)
    return conv, wl, bl


def _conv_to_dense(w_np, cfg):
    """Dense (cout*hout, cin*hin) matrix equivalent to the strided kHx1 conv."""
    cin, cout, k, s, hin, hout = cfg
    m = np.zeros((cout * hout, cin * hin), np.float32)
    for co in range(cout):
        for ho in range(hout):
            for ci in range(cin):
                for j in range(k):
                    m[co * hout + ho, ci * hin + s * ho + j] = w_np[co, ci, j]
    return m


def pack_params(conv, wl, bl):
    """Fold conv -> dense matmul, each BatchNorm into the following layer,
    cast MXU weights to bf16, and fuse all biases into one resident buffer."""
    conv_np = [tuple(np.asarray(t, np.float32) for t in layer) for layer in conv]
    wl_np = np.asarray(wl, np.float32)
    bl_np = np.asarray(bl, np.float32)

    weights, biases = [], []
    prev_scale = np.ones(H_IN, np.float32)     # identity "BN" in front of layer 1
    prev_shift = np.zeros(H_IN, np.float32)
    prev_rows, prev_rows_pad = H_IN, H_IN      # layer-1 columns stay exactly 50

    for (w, b, gamma, beta, rmean, rvar), cfg in zip(conv_np, LAYER_CFG):
        cin, cout, k, s, hin, hout = cfg
        m = _conv_to_dense(w, cfg)                             # (cout*hout, cin*hin)
        w_f = m * prev_scale[None, :]                          # M @ diag(prev_scale)
        b_f = m @ prev_shift + np.repeat(b, hout)              # (cout*hout,)
        rows = cout * hout
        rows_pad = _round_up(rows, 8)
        w_p = np.zeros((rows_pad, prev_rows_pad), np.float32)
        w_p[:rows, :prev_rows] = w_f
        b_p = np.zeros((rows_pad, 1), np.float32)
        b_p[:rows, 0] = b_f
        weights.append(jnp.asarray(w_p, jnp.bfloat16))         # bf16 MXU operand
        biases.append(b_p)
        # this layer's eval-mode BatchNorm folds into the NEXT layer
        scale = gamma / np.sqrt(rvar + BN_EPS)
        shift = beta - rmean * scale
        prev_scale = np.repeat(scale, hout)                    # row index = c*hout + h
        prev_shift = np.repeat(shift, hout)
        prev_rows, prev_rows_pad = rows, rows_pad

    # final Linear with the last BatchNorm folded in; torch .view(-1, 60) order
    # is c*6 + h, matching the (cout*hout) row order above.  Stored transposed
    # (FEAT_PAD, 2) in f32 for the in-kernel VPU/XLU path.
    wl_f = wl_np * prev_scale[None, :]
    bl_f = wl_np @ prev_shift + bl_np
    wl_p = np.zeros((prev_rows_pad, NUM_CLASSES), np.float32)
    wl_p[:prev_rows, :] = wl_f.T
    biases.append(bl_f.reshape(NUM_CLASSES, 1).astype(np.float32))

    bias_cat = np.concatenate(biases, axis=0)
    bias_all = np.zeros((BIAS_ROWS, 1), np.float32)
    bias_all[:bias_cat.shape[0]] = bias_cat

    return tuple(weights) + (jnp.asarray(wl_p), jnp.asarray(bias_all))


# ------------------------- plain-JAX reference model -------------------------
def reference_forward(x_nchw, conv, wl, bl):
    x = x_nchw[..., 0].astype(jnp.float32)                     # (N, C, H)
    for (w, b, gamma, beta, rmean, rvar), cfg in zip(conv, LAYER_CFG):
        cin, cout, k, s, hin, hout = cfg
        z = b[None, :, None] + sum(
            jnp.einsum('oc,nch->noh', w[:, :, j],
                       x[:, :, j: j + s * (hout - 1) + 1: s])
            for j in range(k))
        y = jnp.maximum(z, 0.0)
        scale = gamma / jnp.sqrt(rvar + BN_EPS)
        shift = beta - rmean * scale
        x = y * scale[None, :, None] + shift[None, :, None]
    flat = x.reshape(x.shape[0], FEAT)
    return flat @ wl.T + bl[None, :]


if __name__ == "__main__":
    key = jax.random.PRNGKey(0)
    kp, kx = jax.random.split(key)
    conv, wl, bl = init_raw_params(kp)
    packed = pack_params(conv, wl, bl)

    batch = 2
    # NCHW input, exactly as the torch module expects: (N, 1, 50, 1)
    x = jax.random.normal(kx, (batch, 1, H_IN, 1), jnp.float32)

    out = jax.block_until_ready(iegm_forward(x, packed))
    ref = jax.block_until_ready(reference_forward(x, conv, wl, bl))

    assert out.shape == (batch, NUM_CLASSES)
    # bf16 MXU operands -> loosened tolerance vs the f32 reference
    np.testing.assert_allclose(np.asarray(out), np.asarray(ref), rtol=3e-2, atol=3e-2)
    print("KERNEL_OK")
</pallas_src>

<mosaic_0001>
module attributes {stable_mosaic.version = 11 : i64} {
  func.func @iegm_kernel(%arg0: i32, %arg1: memref<128x50xf32, #tpu.memory_space<vmem>>, %arg2: memref<56x50xbf16, #tpu.memory_space<vmem>>, %arg3: memref<40x56xbf16, #tpu.memory_space<vmem>>, %arg4: memref<32x40xbf16, #tpu.memory_space<vmem>>, %arg5: memref<64x32xbf16, #tpu.memory_space<vmem>>, %arg6: memref<64x64xbf16, #tpu.memory_space<vmem>>, %arg7: memref<64x2xf32, #tpu.memory_space<vmem>>, %arg8: memref<264x1xf32, #tpu.memory_space<vmem>>, %arg9: memref<2x128xf32, #tpu.memory_space<vmem>>) attributes {dimension_semantics = [#tpu.dimension_semantics<parallel>], iteration_bounds = array<i64: 1>, scalar_prefetch = 0 : i64, scratch_operands = 0 : i64, tpu.core_type = #tpu.core_type<tc>, window_params = [{transform_indices = @transform_0, window_bounds = array<i64: 128, 50>}, {pipeline_mode = #tpu.pipeline_mode<synchronous>, transform_indices = @transform_1, window_bounds = array<i64: 56, 50>}, {pipeline_mode = #tpu.pipeline_mode<synchronous>, transform_indices = @transform_2, window_bounds = array<i64: 40, 56>}, {pipeline_mode = #tpu.pipeline_mode<synchronous>, transform_indices = @transform_3, window_bounds = array<i64: 32, 40>}, {pipeline_mode = #tpu.pipeline_mode<synchronous>, transform_indices = @transform_4, window_bounds = array<i64: 64, 32>}, {pipeline_mode = #tpu.pipeline_mode<synchronous>, transform_indices = @transform_5, window_bounds = array<i64: 64, 64>}, {pipeline_mode = #tpu.pipeline_mode<synchronous>, transform_indices = @transform_6, window_bounds = array<i64: 64, 2>}, {pipeline_mode = #tpu.pipeline_mode<synchronous>, transform_indices = @transform_7, window_bounds = array<i64: 264, 1>}, {transform_indices = @transform_8, window_bounds = array<i64: 2, 128>}]} {
    %c0 = arith.constant 0 : index
    %c0_0 = arith.constant 0 : index
    %0 = vector.load %arg8[%c0, %c0_0] : memref<264x1xf32, #tpu.memory_space<vmem>>, vector<264x1xf32>
    %c0_1 = arith.constant 0 : index
    %c0_2 = arith.constant 0 : index
    %1 = vector.load %arg2[%c0_1, %c0_2] : memref<56x50xbf16, #tpu.memory_space<vmem>>, vector<56x50xbf16>
    %c0_3 = arith.constant 0 : index
    %c0_4 = arith.constant 0 : index
    %2 = vector.load %arg1[%c0_3, %c0_4] : memref<128x50xf32, #tpu.memory_space<vmem>>, vector<128x50xf32>
    %3 = arith.truncf %2 : vector<128x50xf32> to vector<128x50xbf16>
    %cst = arith.constant dense<0.000000e+00> : vector<56x128xf32>
    %4 = tpu.matmul %1, %3, %cst {dimension_numbers = #tpu.dot_dimension_numbers<[1], [1], [0], [0], [0, 0, 1, 0], [], []>} : vector<56x50xbf16>, vector<128x50xbf16>, vector<56x128xf32> -> vector<56x128xf32>
    %5 = vector.extract_strided_slice %0 {offsets = [0, 0], sizes = [56, 1], strides = [1, 1]} : vector<264x1xf32> to vector<56x1xf32>
    %6 = vector.broadcast %5 : vector<56x1xf32> to vector<56x128xf32>
    %7 = arith.addf %4, %6 : vector<56x128xf32>
    %cst_5 = arith.constant 0.000000e+00 : f32
    %8 = vector.broadcast %cst_5 : f32 to vector<56x128xf32>
    %9 = arith.maximumf %7, %8 : vector<56x128xf32>
    %c0_6 = arith.constant 0 : index
    %c0_7 = arith.constant 0 : index
    %10 = vector.load %arg3[%c0_6, %c0_7] : memref<40x56xbf16, #tpu.memory_space<vmem>>, vector<40x56xbf16>
    %11 = arith.truncf %9 : vector<56x128xf32> to vector<56x128xbf16>
    %cst_8 = arith.constant dense<0.000000e+00> : vector<40x128xf32>
    %12 = tpu.matmul %10, %11, %cst_8 {dimension_numbers = #tpu.dot_dimension_numbers<[1], [0], [0], [1], [0, 0, 1, 1], [], []>} : vector<40x56xbf16>, vector<56x128xbf16>, vector<40x128xf32> -> vector<40x128xf32>
    %13 = vector.extract_strided_slice %0 {offsets = [56, 0], sizes = [40, 1], strides = [1, 1]} : vector<264x1xf32> to vector<40x1xf32>
    %14 = vector.broadcast %13 : vector<40x1xf32> to vector<40x128xf32>
    %15 = arith.addf %12, %14 : vector<40x128xf32>
    %cst_9 = arith.constant 0.000000e+00 : f32
    %16 = vector.broadcast %cst_9 : f32 to vector<40x128xf32>
    %17 = arith.maximumf %15, %16 : vector<40x128xf32>
    %c0_10 = arith.constant 0 : index
    %c0_11 = arith.constant 0 : index
    %18 = vector.load %arg4[%c0_10, %c0_11] : memref<32x40xbf16, #tpu.memory_space<vmem>>, vector<32x40xbf16>
    %19 = arith.truncf %17 : vector<40x128xf32> to vector<40x128xbf16>
    %cst_12 = arith.constant dense<0.000000e+00> : vector<32x128xf32>
    %20 = tpu.matmul %18, %19, %cst_12 {dimension_numbers = #tpu.dot_dimension_numbers<[1], [0], [0], [1], [0, 0, 1, 1], [], []>} : vector<32x40xbf16>, vector<40x128xbf16>, vector<32x128xf32> -> vector<32x128xf32>
    %21 = vector.extract_strided_slice %0 {offsets = [96, 0], sizes = [32, 1], strides = [1, 1]} : vector<264x1xf32> to vector<32x1xf32>
    %22 = vector.broadcast %21 : vector<32x1xf32> to vector<32x128xf32>
    %23 = arith.addf %20, %22 : vector<32x128xf32>
    %cst_13 = arith.constant 0.000000e+00 : f32
    %24 = vector.broadcast %cst_13 : f32 to vector<32x128xf32>
    %25 = arith.maximumf %23, %24 : vector<32x128xf32>
    %c0_14 = arith.constant 0 : index
    %c0_15 = arith.constant 0 : index
    %26 = vector.load %arg5[%c0_14, %c0_15] : memref<64x32xbf16, #tpu.memory_space<vmem>>, vector<64x32xbf16>
    %27 = arith.truncf %25 : vector<32x128xf32> to vector<32x128xbf16>
    %cst_16 = arith.constant dense<0.000000e+00> : vector<64x128xf32>
    %28 = tpu.matmul %26, %27, %cst_16 {dimension_numbers = #tpu.dot_dimension_numbers<[1], [0], [0], [1], [0, 0, 1, 1], [], []>} : vector<64x32xbf16>, vector<32x128xbf16>, vector<64x128xf32> -> vector<64x128xf32>
    %29 = vector.extract_strided_slice %0 {offsets = [128, 0], sizes = [64, 1], strides = [1, 1]} : vector<264x1xf32> to vector<64x1xf32>
    %30 = vector.broadcast %29 : vector<64x1xf32> to vector<64x128xf32>
    %31 = arith.addf %28, %30 : vector<64x128xf32>
    %cst_17 = arith.constant 0.000000e+00 : f32
    %32 = vector.broadcast %cst_17 : f32 to vector<64x128xf32>
    %33 = arith.maximumf %31, %32 : vector<64x128xf32>
    %c0_18 = arith.constant 0 : index
    %c0_19 = arith.constant 0 : index
    %34 = vector.load %arg6[%c0_18, %c0_19] : memref<64x64xbf16, #tpu.memory_space<vmem>>, vector<64x64xbf16>
    %35 = arith.truncf %33 : vector<64x128xf32> to vector<64x128xbf16>
    %cst_20 = arith.constant dense<0.000000e+00> : vector<64x128xf32>
    %36 = tpu.matmul %34, %35, %cst_20 {dimension_numbers = #tpu.dot_dimension_numbers<[1], [0], [0], [1], [0, 0, 1, 1], [], []>} : vector<64x64xbf16>, vector<64x128xbf16>, vector<64x128xf32> -> vector<64x128xf32>
    %37 = vector.extract_strided_slice %0 {offsets = [192, 0], sizes = [64, 1], strides = [1, 1]} : vector<264x1xf32> to vector<64x1xf32>
    %38 = vector.broadcast %37 : vector<64x1xf32> to vector<64x128xf32>
    %39 = arith.addf %36, %38 : vector<64x128xf32>
    %cst_21 = arith.constant 0.000000e+00 : f32
    %40 = vector.broadcast %cst_21 : f32 to vector<64x128xf32>
    %41 = arith.maximumf %39, %40 : vector<64x128xf32>
    %c0_22 = arith.constant 0 : index
    %c0_23 = arith.constant 0 : index
    %42 = vector.load %arg7[%c0_22, %c0_23] : memref<64x2xf32, #tpu.memory_space<vmem>>, vector<64x2xf32>
    %43 = vector.extract_strided_slice %42 {offsets = [0, 0], sizes = [64, 1], strides = [1, 1]} : vector<64x2xf32> to vector<64x1xf32>
    %44 = vector.broadcast %43 : vector<64x1xf32> to vector<64x128xf32>
    %45 = arith.mulf %41, %44 : vector<64x128xf32>
    %cst_24 = arith.constant dense<0.000000e+00> : vector<128xf32>
    %46 = vector.multi_reduction <add>, %45, %cst_24 [0] : vector<64x128xf32> to vector<128xf32>
    %47 = vector.shape_cast %46 : vector<128xf32> to vector<1x128xf32>
    %48 = vector.extract_strided_slice %42 {offsets = [0, 1], sizes = [64, 1], strides = [1, 1]} : vector<64x2xf32> to vector<64x1xf32>
    %49 = vector.broadcast %48 : vector<64x1xf32> to vector<64x128xf32>
    %50 = arith.mulf %41, %49 : vector<64x128xf32>
    %cst_25 = arith.constant dense<0.000000e+00> : vector<128xf32>
    %51 = vector.multi_reduction <add>, %50, %cst_25 [0] : vector<64x128xf32> to vector<128xf32>
    %52 = vector.shape_cast %51 : vector<128xf32> to vector<1x128xf32>
    %53 = vector.extract_strided_slice %0 {offsets = [256, 0], sizes = [1, 1], strides = [1, 1]} : vector<264x1xf32> to vector<1x1xf32>
    %54 = vector.broadcast %53 : vector<1x1xf32> to vector<1x128xf32>
    %55 = arith.addf %47, %54 : vector<1x128xf32>
    %c0_26 = arith.constant 0 : index
    %c0_27 = arith.constant 0 : index
    %56 = vector.load %arg9[%c0_26, %c0_27] : memref<2x128xf32, #tpu.memory_space<vmem>>, vector<1x128xf32>
    tpu.vector_store %arg9[%c0_26, %c0_27], %55 {strides = array<i32>} : memref<2x128xf32, #tpu.memory_space<vmem>>, vector<1x128xf32>,
    %57 = vector.extract_strided_slice %0 {offsets = [257, 0], sizes = [1, 1], strides = [1, 1]} : vector<264x1xf32> to vector<1x1xf32>
    %58 = vector.broadcast %57 : vector<1x1xf32> to vector<1x128xf32>
    %59 = arith.addf %52, %58 : vector<1x128xf32>
    %c1 = arith.constant 1 : index
    %c0_28 = arith.constant 0 : index
    %60 = vector.load %arg9[%c1, %c0_28] : memref<2x128xf32, #tpu.memory_space<vmem>>, vector<1x128xf32>
    tpu.vector_store %arg9[%c1, %c0_28], %59 {strides = array<i32>} : memref<2x128xf32, #tpu.memory_space<vmem>>, vector<1x128xf32>,
    return
  }
  func.func @transform_0(%arg0: i32) -> (i32, i32) {
    %c0_i32 = arith.constant 0 : i32
    %c0_i32_0 = arith.constant 0 : i32
    return %arg0, %c0_i32 : i32, i32
  }
  func.func @transform_1(%arg0: i32) -> (i32, i32) {
    %c0_i32 = arith.constant 0 : i32
    %c0_i32_0 = arith.constant 0 : i32
    %c0_i32_1 = arith.constant 0 : i32
    return %c0_i32, %c0_i32_0 : i32, i32
  }
  func.func @transform_2(%arg0: i32) -> (i32, i32) {
    %c0_i32 = arith.constant 0 : i32
    %c0_i32_0 = arith.constant 0 : i32
    %c0_i32_1 = arith.constant 0 : i32
    return %c0_i32, %c0_i32_0 : i32, i32
  }
  func.func @transform_3(%arg0: i32) -> (i32, i32) {
    %c0_i32 = arith.constant 0 : i32
    %c0_i32_0 = arith.constant 0 : i32
    %c0_i32_1 = arith.constant 0 : i32
    return %c0_i32, %c0_i32_0 : i32, i32
  }
  func.func @transform_4(%arg0: i32) -> (i32, i32) {
    %c0_i32 = arith.constant 0 : i32
    %c0_i32_0 = arith.constant 0 : i32
    %c0_i32_1 = arith.constant 0 : i32
    return %c0_i32, %c0_i32_0 : i32, i32
  }
  func.func @transform_5(%arg0: i32) -> (i32, i32) {
    %c0_i32 = arith.constant 0 : i32
    %c0_i32_0 = arith.constant 0 : i32
    %c0_i32_1 = arith.constant 0 : i32
    return %c0_i32, %c0_i32_0 : i32, i32
  }
  func.func @transform_6(%arg0: i32) -> (i32, i32) {
    %c0_i32 = arith.constant 0 : i32
    %c0_i32_0 = arith.constant 0 : i32
    %c0_i32_1 = arith.constant 0 : i32
    return %c0_i32, %c0_i32_0 : i32, i32
  }
  func.func @transform_7(%arg0: i32) -> (i32, i32) {
    %c0_i32 = arith.constant 0 : i32
    %c0_i32_0 = arith.constant 0 : i32
    %c0_i32_1 = arith.constant 0 : i32
    return %c0_i32, %c0_i32_0 : i32, i32
  }
  func.func @transform_8(%arg0: i32) -> (i32, i32) {
    %c0_i32 = arith.constant 0 : i32
    %c0_i32_0 = arith.constant 0 : i32
    return %c0_i32, %arg0 : i32, i32
  }
}

</mosaic_0001>

<llo_original>
// kernel: tpu_custom_call.1
$region0: #{tpu_custom_call.1}
  #allocation0 [shape = 'u32[]', space=smem, size = 0x4, offset = 0x4, fixed_abs, tag = 'smem constant byte address 0x4 - core index']
  #allocation1 [shape = 'u32[144,128]{1,0:T(1,128)}', space=vmem, size = 0x12000, scoped, tag = 'internal scratch']
  %s0 = inlined_call_operand.vmem [shape: f32[2,50], index: 0, kind: input, shape index: {}]
  %s1 = inlined_call_operand.vmem [shape: bf16[56,50], index: 1, kind: input, shape index: {}]
  %s2 = inlined_call_operand.vmem [shape: bf16[40,56], index: 2, kind: input, shape index: {}]
  %s3 = inlined_call_operand.vmem [shape: bf16[32,40], index: 3, kind: input, shape index: {}]
  %s4 = inlined_call_operand.vmem [shape: bf16[64,32], index: 4, kind: input, shape index: {}]
  %s5 = inlined_call_operand.vmem [shape: bf16[64,64], index: 5, kind: input, shape index: {}]
  %s6 = inlined_call_operand.vmem [shape: f32[64,2], index: 6, kind: input, shape index: {}]
  %s7 = inlined_call_operand.vmem [shape: f32[264,1], index: 7, kind: input, shape index: {}]
  %s8 = inlined_call_operand.hbm [shape: f32[2,2], index: 8, kind: output, shape index: {}]
  %s9 = sld [smem:[#allocation0]]
  $region42: #{tpu_custom_call.1} parent=0
    _
  %s11 = ssub.s32 1, %s9
  %s12 = scalar_select 0, %s11, %s9
  $region1: #{tpu_custom_call.1} parent=0
    #allocation2 [shape = 'u8[1024]{0}', space=vmem, size = 0x400, scoped, tag = 'output window, operand 0, single buffered']
    #allocation3 [shape = 's32[1]{0}', space=sflag, size = 0x4, scoped, tag = 'scoped memory for tpu_custom_call.1']
    %13 = vsyncpa [#allocation3], 0
    // Predicated region
    $region2: #{tpu_custom_call.1} parent=1 // pred_check
      _
    $region3: #{tpu_custom_call.1} parent=1 // pred_check_branch
      %15 = sbr.rel (0) target = $region5
    $region4: #{tpu_custom_call.1} parent=1 // pred_region
      _
    $region5: #{tpu_custom_call.1} parent=1 // pred_fallthru
      _
    // Predicated region
    $region6: #{tpu_custom_call.1} parent=1 // pred_check
      _
    $region7: #{tpu_custom_call.1} parent=1 // pred_check_branch
      %17 = sbr.rel (0) target = $region9
    $region8: #{tpu_custom_call.1} parent=1 // pred_region
      _
    $region9: #{tpu_custom_call.1} parent=1 // pred_fallthru
      _
    // Predicated region
    $region10: #{tpu_custom_call.1} parent=1 // pred_check
      _
    $region11: #{tpu_custom_call.1} parent=1 // pred_check_branch
      %19 = sbr.rel (0) target = $region13
    $region12: #{tpu_custom_call.1} parent=1 // pred_region
      _
    $region13: #{tpu_custom_call.1} parent=1 // pred_fallthru
      _
    // Predicated region
    $region14: #{tpu_custom_call.1} parent=1 // pred_check
      _
    $region15: #{tpu_custom_call.1} parent=1 // pred_check_branch
      %21 = sbr.rel (0) target = $region17
    $region16: #{tpu_custom_call.1} parent=1 // pred_region
      _
    $region17: #{tpu_custom_call.1} parent=1 // pred_fallthru
      _
    // Predicated region
    $region18: #{tpu_custom_call.1} parent=1 // pred_check
      _
    $region19: #{tpu_custom_call.1} parent=1 // pred_check_branch
      %23 = sbr.rel (0) target = $region21
    $region20: #{tpu_custom_call.1} parent=1 // pred_region
      _
    $region21: #{tpu_custom_call.1} parent=1 // pred_fallthru
      _
    // Predicated region
    $region22: #{tpu_custom_call.1} parent=1 // pred_check
      _
    $region23: #{tpu_custom_call.1} parent=1 // pred_check_branch
      %25 = sbr.rel (0) target = $region25
    $region24: #{tpu_custom_call.1} parent=1 // pred_region
      _
    $region25: #{tpu_custom_call.1} parent=1 // pred_fallthru
      _
    // Predicated region
    $region26: #{tpu_custom_call.1} parent=1 // pred_check
      _
    $region27: #{tpu_custom_call.1} parent=1 // pred_check_branch
      %27 = sbr.rel (0) target = $region29
    $region28: #{tpu_custom_call.1} parent=1 // pred_region
      _
    $region29: #{tpu_custom_call.1} parent=1 // pred_fallthru
      _
    // Predicated region
    $region30: #{tpu_custom_call.1} parent=1 // pred_check
      _
    $region31: #{tpu_custom_call.1} parent=1 // pred_check_branch
      %29 = sbr.rel (0) target = $region33
    $region32: #{tpu_custom_call.1} parent=1 // pred_region
      _
    $region33: #{tpu_custom_call.1} parent=1 // pred_fallthru
      _
    %v31 = vld [vmem:[%s7] sm:$0xff]
    %v32 = vld [vmem:[%s7 + $0x8] sm:$0xff]
    %v33 = vld [vmem:[%s7 + $0x10] sm:$0xff]
    %v34 = vld [vmem:[%s7 + $0x18] sm:$0xff]
    %v35 = vld [vmem:[%s7 + $0x20] sm:$0xff]
    %v36 = vld [vmem:[%s7 + $0x28] sm:$0xff]
    %v37 = vld [vmem:[%s7 + $0x30] sm:$0xff]
    %v38 = vld [vmem:[%s7 + $0x38] sm:$0xff]
    %v39 = vld [vmem:[%s7 + $0x40] sm:$0xff]
    %v40 = vld [vmem:[%s7 + $0x48] sm:$0xff]
    %v41 = vld [vmem:[%s7 + $0x50] sm:$0xff]
    %v42 = vld [vmem:[%s7 + $0x58] sm:$0xff]
    %v43 = vld [vmem:[%s7 + $0x60] sm:$0xff]
    %v44 = vld [vmem:[%s7 + $0x68] sm:$0xff]
    %v45 = vld [vmem:[%s7 + $0x70] sm:$0xff]
    %v46 = vld [vmem:[%s7 + $0x78] sm:$0xff]
    %v47 = vld [vmem:[%s7 + $0x80] sm:$0xff]
    %v48 = vld [vmem:[%s7 + $0x88] sm:$0xff]
    %v49 = vld [vmem:[%s7 + $0x90] sm:$0xff]
    %v50 = vld [vmem:[%s7 + $0x98] sm:$0xff]
    %v51 = vld [vmem:[%s7 + $0xa0] sm:$0xff]
    %v52 = vld [vmem:[%s7 + $0xa8] sm:$0xff]
    %v53 = vld [vmem:[%s7 + $0xb0] sm:$0xff]
    %v54 = vld [vmem:[%s7 + $0xb8] sm:$0xff]
    %v55 = vld [vmem:[%s7 + $0xc0] sm:$0xff]
    %v56 = vld [vmem:[%s7 + $0xc8] sm:$0xff]
    %v57 = vld [vmem:[%s7 + $0xd0] sm:$0xff]
    %v58 = vld [vmem:[%s7 + $0xd8] sm:$0xff]
    %v59 = vld [vmem:[%s7 + $0xe0] sm:$0xff]
    %v60 = vld [vmem:[%s7 + $0xe8] sm:$0xff]
    %v61 = vld [vmem:[%s7 + $0xf0] sm:$0xff]
    %v62 = vld [vmem:[%s7 + $0xf8] sm:$0xff]
    %v63 = vld [vmem:[%s7 + $0x100] sm:$0xff]
    %v64 = vld [vmem:[%s1] sm:$0xf]
    %v65 = vld [vmem:[%s1 + $0x4] sm:$0xf]
    %v66 = vld [vmem:[%s1 + $0x8] sm:$0xf]
    %v67 = vld [vmem:[%s1 + $0xc] sm:$0xf]
    %v68 = vld [vmem:[%s1 + $0x10] sm:$0xf]
    %v69 = vld [vmem:[%s1 + $0x14] sm:$0xf]
    %v70 = vld [vmem:[%s1 + $0x18] sm:$0xf]
    %v71 = vld [vmem:[%s0] sm:$0xff]
    %v72 = vld [vmem:[%s0 + $0x8] sm:$0xff]
    %v73 = vld [vmem:[%s0 + $0x10] sm:$0xff]
    %v74 = vld [vmem:[%s0 + $0x18] sm:$0xff]
    %v75 = vld [vmem:[%s0 + $0x20] sm:$0xff]
    %v76 = vld [vmem:[%s0 + $0x28] sm:$0xff]
    %v77 = vld [vmem:[%s0 + $0x30] sm:$0xff]
    %v78 = vld [vmem:[%s0 + $0x38] sm:$0xff]
    %v79 = vld [vmem:[%s0 + $0x40] sm:$0xff]
    %v80 = vld [vmem:[%s0 + $0x48] sm:$0xff]
    %v81 = vld [vmem:[%s0 + $0x50] sm:$0xff]
    %v82 = vld [vmem:[%s0 + $0x58] sm:$0xff]
    %v83 = vld [vmem:[%s0 + $0x60] sm:$0xff]
    %v84 = vld [vmem:[%s0 + $0x68] sm:$0xff]
    %v85 = vld [vmem:[%s0 + $0x70] sm:$0xff]
    %v86 = vld [vmem:[%s0 + $0x78] sm:$0xff]
    %v87 = vpack.c.bf16 %v72, %v71
    %v88 = vpack.c.bf16 %v74, %v73
    %v89 = vpack.c.bf16 %v76, %v75
    %v90 = vpack.c.bf16 %v78, %v77
    %v91 = vpack.c.bf16 %v80, %v79
    %v92 = vpack.c.bf16 %v82, %v81
    %v93 = vpack.c.bf16 %v84, %v83
    %v94 = vpack.c.bf16 %v86, %v85
    %96 = vset.pattern.permute.xlu0 0
    %97 = vperm.xlu0 %96, %v31
    %v98 = vpop.permute.xlu0 %97
    %101 = vset.pattern.permute.xlu0 0
    %102 = vperm.xlu0 %101, %v32
    %v103 = vpop.permute.xlu0 %102
    %106 = vset.pattern.permute.xlu0 0
    %107 = vperm.xlu0 %106, %v33
    %v108 = vpop.permute.xlu0 %107
    %111 = vset.pattern.permute.xlu0 0
    %112 = vperm.xlu0 %111, %v34
    %v113 = vpop.permute.xlu0 %112
    %116 = vset.pattern.permute.xlu0 0
    %117 = vperm.xlu0 %116, %v35
    %v118 = vpop.permute.xlu0 %117
    %121 = vset.pattern.permute.xlu0 0
    %122 = vperm.xlu0 %121, %v36
    %v123 = vpop.permute.xlu0 %122
    %126 = vset.pattern.permute.xlu0 0
    %127 = vperm.xlu0 %126, %v37
    %v128 = vpop.permute.xlu0 %127
    %v137 = vunpack.c.l.b16 %v64
    %v138 = vunpack.c.l.b16 %v65
    %v139 = vunpack.c.l.b16 %v66
    %v140 = vunpack.c.l.b16 %v67
    %v141 = vunpack.c.l.b16 %v68
    %v142 = vunpack.c.l.b16 %v69
    %v143 = vunpack.c.l.b16 %v70
    %v144 = vpack.c.b16 %v138, %v137
    %v145 = vpack.c.b16 %v140, %v139
    %v146 = vpack.c.b16 %v142, %v141
    %v147 = vpack.c.b16 %v143, %v143
    %vm148 = vcmask 408576
    %v150 = vsel %vm148, %v144, 0
    %v153 = vsel %vm148, %v145, 0
    %v156 = vsel %vm148, %v146, 0
    %v159 = vsel %vm148, %v147, 0
    %v162 = vsel %vm148, %v87, 0
    %v165 = vsel %vm148, %v88, 0
    %v168 = vsel %vm148, %v89, 0
    %v171 = vsel %vm148, %v90, 0
    %v174 = vsel %vm148, %v91, 0
    %v177 = vsel %vm148, %v92, 0
    %v180 = vsel %vm148, %v93, 0
    %v183 = vsel %vm148, %v94, 0
    %185 = vmatprep.subr.bf16.mxu0 0
    %186 = vmatpush1.bf16.xpose.msra.mxu0 %v162
    %187 = vmatprep.subr.bf16.mxu0 0
    %188 = vmatpush1.bf16.xpose.msra.mxu0 %v165
    %189 = vmatprep.subr.bf16.mxu0 0
    %190 = vmatpush1.bf16.xpose.msra.mxu0 %v168
    %191 = vmatprep.subr.bf16.mxu0 0
    %192 = vmatpush1.bf16.xpose.msra.mxu0 %v171
    %193 = vmatprep.subr.bf16.mxu0 0
    %194 = vmatpush1.bf16.xpose.msra.mxu0 %v174
    %195 = vmatprep.subr.bf16.mxu0 0
    %196 = vmatpush1.bf16.xpose.msra.mxu0 %v177
    %197 = vmatprep.subr.bf16.mxu0 0
    %198 = vmatpush1.bf16.xpose.msra.mxu0 %v180
    %199 = vmatprep.subr.bf16.mxu0 0
    %200 = vmatpush1.bf16.xpose.msra.mxu0 %v183
    %201 = vmatprep.subr.bf16.mxu0 0
    %202 = vmatpush1.bf16.xpose.msra.mxu0 0
    %203 = vmatprep.subr.bf16.mxu0 0
    %204 = vmatpush1.bf16.xpose.msra.mxu0 0
    %205 = vmatprep.subr.bf16.mxu0 0
    %206 = vmatpush1.bf16.xpose.msra.mxu0 0
    %207 = vmatprep.subr.bf16.mxu0 0
    %208 = vmatpush1.bf16.xpose.msra.mxu0 0
    %209 = vmatprep.subr.bf16.mxu0 0
    %210 = vmatpush1.bf16.xpose.msra.mxu0 0
    %211 = vmatprep.subr.bf16.mxu0 0
    %212 = vmatpush1.bf16.xpose.msra.mxu0 0
    %213 = vmatprep.subr.bf16.mxu0 0
    %214 = vmatpush1.bf16.xpose.msra.mxu0 0
    %215 = vmatprep.subr.bf16.mxu0 0
    %216 = vmatpush1.bf16.xpose.msra.mxu0 0
    %217 = vmatprep.mubr.bf16.mxu0 0
    %218 = vmatmul.mubr.bf16.gmra.mrb[0].mxu0 %v150
    %v219 = vpop.f32.mrb[0].mxu0
    %v220 = vadd.f32 %v98, %v219
    %v221 = vpop.f32.mrb[0].mxu0
    %v222 = vpop.f32.mrb[0].mxu0
    %v223 = vadd.f32 %v103, %v222
    %v224 = vpop.f32.mrb[0].mxu0
    %225 = vmatprep.mubr.bf16.mxu0 0
    %226 = vmatmul.mubr.bf16.gmra.mrb[0].mxu0 %v153
    %v227 = vpop.f32.mrb[0].mxu0
    %v228 = vadd.f32 %v108, %v227
    %v229 = vpop.f32.mrb[0].mxu0
    %v230 = vpop.f32.mrb[0].mxu0
    %v231 = vadd.f32 %v113, %v230
    %v232 = vpop.f32.mrb[0].mxu0
    %233 = vmatprep.mubr.bf16.mxu0 0
    %234 = vmatmul.mubr.bf16.gmra.mrb[0].mxu0 %v156
    %v235 = vpop.f32.mrb[0].mxu0
    %v236 = vadd.f32 %v118, %v235
    %v237 = vpop.f32.mrb[0].mxu0
    %v238 = vpop.f32.mrb[0].mxu0
    %v239 = vadd.f32 %v123, %v238
    %v240 = vpop.f32.mrb[0].mxu0
    %241 = vmatprep.mubr.bf16.mxu0 0
    %242 = vmatmul.mubr.bf16.gmra.mrb[0].mxu0 %v159
    %v243 = vpop.f32.mrb[0].mxu0
    %v244 = vadd.f32 %v128, %v243
    %v245 = vpop.f32.mrb[0].mxu0
    %v246 = vpop.f32.mrb[0].mxu0
    %v247 = vpop.f32.mrb[0].mxu0
    %248 = vdwg.mxu0
    %v249 = vmax.f32 %v220, 0.0
    %v250 = vmax.f32 %v223, 0.0
    %v251 = vmax.f32 %v228, 0.0
    %v252 = vmax.f32 %v231, 0.0
    %v253 = vmax.f32 %v236, 0.0
    %v254 = vmax.f32 %v239, 0.0
    %v255 = vmax.f32 %v244, 0.0
    %v256 = vld [vmem:[%s2] sm:$0xf]
    %v257 = vld [vmem:[%s2 + $0x4] sm:$0xf]
    %v258 = vld [vmem:[%s2 + $0x8] sm:$0xf]
    %v259 = vld [vmem:[%s2 + $0xc] sm:$0xf]
    %v260 = vld [vmem:[%s2 + $0x10] sm:$0xf]
    %v261 = vpack.c.bf16 %v250, %v249
    %v262 = vpack.c.bf16 %v252, %v251
    %v263 = vpack.c.bf16 %v254, %v253
    %v264 = vpack.c.bf16 %v255, %v255
    %266 = vset.pattern.permute.xlu0 0
    %267 = vperm.xlu0 %266, %v38
    %v268 = vpop.permute.xlu0 %267
    %271 = vset.pattern.permute.xlu0 0
    %272 = vperm.xlu0 %271, %v39
    %v273 = vpop.permute.xlu0 %272
    %276 = vset.pattern.permute.xlu0 0
    %277 = vperm.xlu0 %276, %v40
    %v278 = vpop.permute.xlu0 %277
    %281 = vset.pattern.permute.xlu0 0
    %282 = vperm.xlu0 %281, %v41
    %v283 = vpop.permute.xlu0 %282
    %286 = vset.pattern.permute.xlu0 0
    %287 = vperm.xlu0 %286, %v42
    %v288 = vpop.permute.xlu0 %287
    %v295 = vunpack.c.l.b16 %v256
    %v296 = vunpack.c.l.b16 %v257
    %v297 = vunpack.c.l.b16 %v258
    %v298 = vunpack.c.l.b16 %v259
    %v299 = vunpack.c.l.b16 %v260
    %v300 = vpack.c.b16 %v296, %v295
    %v301 = vpack.c.b16 %v298, %v297
    %v302 = vpack.c.b16 %v299, %v299
    %vm303 = vcmask 457728
    %v305 = vsel %vm303, %v300, 0
    %v308 = vsel %vm303, %v301, 0
    %v311 = vsel %vm303, %v302, 0
    %vm313 = vcmask 1043456
    %v315 = vsel %vm313, %v264, 0
    %317 = vmatprep.subr.bf16.mxu0 0
    %318 = vmatpush1.bf16.msra.mxu0 %v261
    %319 = vmatprep.subr.bf16.mxu0 0
    %320 = vmatpush1.bf16.msra.mxu0 %v262
    %321 = vmatprep.subr.bf16.mxu0 0
    %322 = vmatpush1.bf16.msra.mxu0 %v263
    %323 = vmatprep.subr.bf16.mxu0 0
    %324 = vmatpush1.bf16.msra.mxu0 %v315
    %325 = vmatprep.subr.bf16.mxu0 0
    %326 = vmatpush1.bf16.msra.mxu0 0
    %327 = vmatprep.subr.bf16.mxu0 0
    %328 = vmatpush1.bf16.msra.mxu0 0
    %329 = vmatprep.subr.bf16.mxu0 0
    %330 = vmatpush1.bf16.msra.mxu0 0
    %331 = vmatprep.subr.bf16.mxu0 0
    %332 = vmatpush1.bf16.msra.mxu0 0
    %333 = vmatprep.subr.bf16.mxu0 0
    %334 = vmatpush1.bf16.msra.mxu0 0
    %335 = vmatprep.subr.bf16.mxu0 0
    %336 = vmatpush1.bf16.msra.mxu0 0
    %337 = vmatprep.subr.bf16.mxu0 0
    %338 = vmatpush1.bf16.msra.mxu0 0
    %339 = vmatprep.subr.bf16.mxu0 0
    %340 = vmatpush1.bf16.msra.mxu0 0
    %341 = vmatprep.subr.bf16.mxu0 0
    %342 = vmatpush1.bf16.msra.mxu0 0
    %343 = vmatprep.subr.bf16.mxu0 0
    %344 = vmatpush1.bf16.msra.mxu0 0
    %345 = vmatprep.subr.bf16.mxu0 0
    %346 = vmatpush1.bf16.msra.mxu0 0
    %347 = vmatprep.subr.bf16.mxu0 0
    %348 = vmatpush1.bf16.msra.mxu0 0
    %349 = vmatprep.mubr.bf16.mxu0 0
    %350 = vmatmul.mubr.bf16.gmra.mrb[0].mxu0 %v305
    %v351 = vpop.f32.mrb[0].mxu0
    %v352 = vadd.f32 %v268, %v351
    %v353 = vpop.f32.mrb[0].mxu0
    %v354 = vpop.f32.mrb[0].mxu0
    %v355 = vadd.f32 %v273, %v354
    %v356 = vpop.f32.mrb[0].mxu0
    %357 = vmatprep.mubr.bf16.mxu0 0
    %358 = vmatmul.mubr.bf16.gmra.mrb[0].mxu0 %v308
    %v359 = vpop.f32.mrb[0].mxu0
    %v360 = vadd.f32 %v278, %v359
    %v361 = vpop.f32.mrb[0].mxu0
    %v362 = vpop.f32.mrb[0].mxu0
    %v363 = vadd.f32 %v283, %v362
    %v364 = vpop.f32.mrb[0].mxu0
    %365 = vmatprep.mubr.bf16.mxu0 0
    %366 = vmatmul.mubr.bf16.gmra.mrb[0].mxu0 %v311
    %v367 = vpop.f32.mrb[0].mxu0
    %v368 = vadd.f32 %v288, %v367
    %v369 = vpop.f32.mrb[0].mxu0
    %v370 = vpop.f32.mrb[0].mxu0
    %v371 = vpop.f32.mrb[0].mxu0
    %372 = vdwg.mxu0
    %v373 = vmax.f32 %v352, 0.0
    %v374 = vmax.f32 %v355, 0.0
    %v375 = vmax.f32 %v360, 0.0
    %v376 = vmax.f32 %v363, 0.0
    %v377 = vmax.f32 %v368, 0.0
    %v378 = vld [vmem:[%s3] sm:$0xf]
    %v379 = vld [vmem:[%s3 + $0x4] sm:$0xf]
    %v380 = vld [vmem:[%s3 + $0x8] sm:$0xf]
    %v381 = vld [vmem:[%s3 + $0xc] sm:$0xf]
    %v382 = vpack.c.bf16 %v374, %v373
    %v383 = vpack.c.bf16 %v376, %v375
    %v384 = vpack.c.bf16 %v377, %v377
    %386 = vset.pattern.permute.xlu0 0
    %387 = vperm.xlu0 %386, %v43
    %v388 = vpop.permute.xlu0 %387
    %391 = vset.pattern.permute.xlu0 0
    %392 = vperm.xlu0 %391, %v44
    %v393 = vpop.permute.xlu0 %392
    %396 = vset.pattern.permute.xlu0 0
    %397 = vperm.xlu0 %396, %v45
    %v398 = vpop.permute.xlu0 %397
    %401 = vset.pattern.permute.xlu0 0
    %402 = vperm.xlu0 %401, %v46
    %v403 = vpop.permute.xlu0 %402
    %v409 = vunpack.c.l.b16 %v378
    %v410 = vunpack.c.l.b16 %v379
    %v411 = vunpack.c.l.b16 %v380
    %v412 = vunpack.c.l.b16 %v381
    %v413 = vpack.c.b16 %v410, %v409
    %v414 = vpack.c.b16 %v412, %v411
    %vm415 = vcmask 326656
    %v417 = vsel %vm415, %v413, 0
    %v420 = vsel %vm415, %v414, 0
    %v423 = vsel %vm313, %v384, 0
    %425 = vmatprep.subr.bf16.mxu0 0
    %426 = vmatpush1.bf16.msra.mxu0 %v382
    %427 = vmatprep.subr.bf16.mxu0 0
    %428 = vmatpush1.bf16.msra.mxu0 %v383
    %429 = vmatprep.subr.bf16.mxu0 0
    %430 = vmatpush1.bf16.msra.mxu0 %v423
    %431 = vmatprep.subr.bf16.mxu0 0
    %432 = vmatpush1.bf16.msra.mxu0 0
    %433 = vmatprep.subr.bf16.mxu0 0
    %434 = vmatpush1.bf16.msra.mxu0 0
    %435 = vmatprep.subr.bf16.mxu0 0
    %436 = vmatpush1.bf16.msra.mxu0 0
    %437 = vmatprep.subr.bf16.mxu0 0
    %438 = vmatpush1.bf16.msra.mxu0 0
    %439 = vmatprep.subr.bf16.mxu0 0
    %440 = vmatpush1.bf16.msra.mxu0 0
    %441 = vmatprep.subr.bf16.mxu0 0
    %442 = vmatpush1.bf16.msra.mxu0 0
    %443 = vmatprep.subr.bf16.mxu0 0
    %444 = vmatpush1.bf16.msra.mxu0 0
    %445 = vmatprep.subr.bf16.mxu0 0
    %446 = vmatpush1.bf16.msra.mxu0 0
    %447 = vmatprep.subr.bf16.mxu0 0
    %448 = vmatpush1.bf16.msra.mxu0 0
    %449 = vmatprep.subr.bf16.mxu0 0
    %450 = vmatpush1.bf16.msra.mxu0 0
    %451 = vmatprep.subr.bf16.mxu0 0
    %452 = vmatpush1.bf16.msra.mxu0 0
    %453 = vmatprep.subr.bf16.mxu0 0
    %454 = vmatpush1.bf16.msra.mxu0 0
    %455 = vmatprep.subr.bf16.mxu0 0
    %456 = vmatpush1.bf16.msra.mxu0 0
    %457 = vmatprep.mubr.bf16.mxu0 0
    %458 = vmatmul.mubr.bf16.gmra.mrb[0].mxu0 %v417
    %v459 = vpop.f32.mrb[0].mxu0
    %v460 = vadd.f32 %v388, %v459
    %v461 = vpop.f32.mrb[0].mxu0
    %v462 = vpop.f32.mrb[0].mxu0
    %v463 = vadd.f32 %v393, %v462
    %v464 = vpop.f32.mrb[0].mxu0
    %465 = vmatprep.mubr.bf16.mxu0 0
    %466 = vmatmul.mubr.bf16.gmra.mrb[0].mxu0 %v420
    %v467 = vpop.f32.mrb[0].mxu0
    %v468 = vadd.f32 %v398, %v467
    %v469 = vpop.f32.mrb[0].mxu0
    %v470 = vpop.f32.mrb[0].mxu0
    %v471 = vadd.f32 %v403, %v470
    %v472 = vpop.f32.mrb[0].mxu0
    %473 = vdwg.mxu0
    %v474 = vmax.f32 %v460, 0.0
    %v475 = vmax.f32 %v463, 0.0
    %v476 = vmax.f32 %v468, 0.0
    %v477 = vmax.f32 %v471, 0.0
    %v478 = vld [vmem:[%s4] sm:$0xf]
    %v479 = vld [vmem:[%s4 + $0x4] sm:$0xf]
    %v480 = vld [vmem:[%s4 + $0x8] sm:$0xf]
    %v481 = vld [vmem:[%s4 + $0xc] sm:$0xf]
    %v482 = vld [vmem:[%s4 + $0x10] sm:$0xf]
    %v483 = vld [vmem:[%s4 + $0x14] sm:$0xf]
    %v484 = vld [vmem:[%s4 + $0x18] sm:$0xf]
    %v485 = vld [vmem:[%s4 + $0x1c] sm:$0xf]
    %v486 = vpack.c.bf16 %v475, %v474
    %v487 = vpack.c.bf16 %v477, %v476
    %489 = vset.pattern.permute.xlu0 0
    %490 = vperm.xlu0 %489, %v47
    %v491 = vpop.permute.xlu0 %490
    %494 = vset.pattern.permute.xlu0 0
    %495 = vperm.xlu0 %494, %v48
    %v496 = vpop.permute.xlu0 %495
    %499 = vset.pattern.permute.xlu0 0
    %500 = vperm.xlu0 %499, %v49
    %v501 = vpop.permute.xlu0 %500
    %504 = vset.pattern.permute.xlu0 0
    %505 = vperm.xlu0 %504, %v50
    %v506 = vpop.permute.xlu0 %505
    %509 = vset.pattern.permute.xlu0 0
    %510 = vperm.xlu0 %509, %v51
    %v511 = vpop.permute.xlu0 %510
    %514 = vset.pattern.permute.xlu0 0
    %515 = vperm.xlu0 %514, %v52
    %v516 = vpop.permute.xlu0 %515
    %519 = vset.pattern.permute.xlu0 0
    %520 = vperm.xlu0 %519, %v53
    %v521 = vpop.permute.xlu0 %520
    %524 = vset.pattern.permute.xlu0 0
    %525 = vperm.xlu0 %524, %v54
    %v526 = vpop.permute.xlu0 %525
    %v536 = vunpack.c.l.b16 %v478
    %v537 = vunpack.c.l.b16 %v479
    %v538 = vunpack.c.l.b16 %v480
    %v539 = vunpack.c.l.b16 %v481
    %v540 = vunpack.c.l.b16 %v482
    %v541 = vunpack.c.l.b16 %v483
    %v542 = vunpack.c.l.b16 %v484
    %v543 = vunpack.c.l.b16 %v485
    %v544 = vpack.c.b16 %v537, %v536
    %v545 = vpack.c.b16 %v539, %v538
    %v546 = vpack.c.b16 %v541, %v540
    %v547 = vpack.c.b16 %v543, %v542
    %vm548 = vcmask 261120
    %v550 = vsel %vm548, %v544, 0
    %v553 = vsel %vm548, %v545, 0
    %v556 = vsel %vm548, %v546, 0
    %v559 = vsel %vm548, %v547, 0
    %561 = vmatprep.subr.bf16.mxu0 0
    %562 = vmatpush1.bf16.msra.mxu0 %v486
    %563 = vmatprep.subr.bf16.mxu0 0
    %564 = vmatpush1.bf16.msra.mxu0 %v487
    %565 = vmatprep.subr.bf16.mxu0 0
    %566 = vmatpush1.bf16.msra.mxu0 0
    %567 = vmatprep.subr.bf16.mxu0 0
    %568 = vmatpush1.bf16.msra.mxu0 0
    %569 = vmatprep.subr.bf16.mxu0 0
    %570 = vmatpush1.bf16.msra.mxu0 0
    %571 = vmatprep.subr.bf16.mxu0 0
    %572 = vmatpush1.bf16.msra.mxu0 0
    %573 = vmatprep.subr.bf16.mxu0 0
    %574 = vmatpush1.bf16.msra.mxu0 0
    %575 = vmatprep.subr.bf16.mxu0 0
    %576 = vmatpush1.bf16.msra.mxu0 0
    %577 = vmatprep.subr.bf16.mxu0 0
    %578 = vmatpush1.bf16.msra.mxu0 0
    %579 = vmatprep.subr.bf16.mxu0 0
    %580 = vmatpush1.bf16.msra.mxu0 0
    %581 = vmatprep.subr.bf16.mxu0 0
    %582 = vmatpush1.bf16.msra.mxu0 0
    %583 = vmatprep.subr.bf16.mxu0 0
    %584 = vmatpush1.bf16.msra.mxu0 0
    %585 = vmatprep.subr.bf16.mxu0 0
    %586 = vmatpush1.bf16.msra.mxu0 0
    %587 = vmatprep.subr.bf16.mxu0 0
    %588 = vmatpush1.bf16.msra.mxu0 0
    %589 = vmatprep.subr.bf16.mxu0 0
    %590 = vmatpush1.bf16.msra.mxu0 0
    %591 = vmatprep.subr.bf16.mxu0 0
    %592 = vmatpush1.bf16.msra.mxu0 0
    %593 = vmatprep.mubr.bf16.mxu0 0
    %594 = vmatmul.mubr.bf16.gmra.mrb[0].mxu0 %v550
    %v595 = vpop.f32.mrb[0].mxu0
    %v596 = vadd.f32 %v491, %v595
    %v597 = vpop.f32.mrb[0].mxu0
    %v598 = vpop.f32.mrb[0].mxu0
    %v599 = vadd.f32 %v496, %v598
    %v600 = vpop.f32.mrb[0].mxu0
    %601 = vmatprep.mubr.bf16.mxu0 0
    %602 = vmatmul.mubr.bf16.gmra.mrb[0].mxu0 %v553
    %v603 = vpop.f32.mrb[0].mxu0
    %v604 = vadd.f32 %v501, %v603
    %v605 = vpop.f32.mrb[0].mxu0
    %v606 = vpop.f32.mrb[0].mxu0
    %v607 = vadd.f32 %v506, %v606
    %v608 = vpop.f32.mrb[0].mxu0
    %609 = vmatprep.mubr.bf16.mxu0 0
    %610 = vmatmul.mubr.bf16.gmra.mrb[0].mxu0 %v556
    %v611 = vpop.f32.mrb[0].mxu0
    %v612 = vadd.f32 %v511, %v611
    %v613 = vpop.f32.mrb[0].mxu0
    %v614 = vpop.f32.mrb[0].mxu0
    %v615 = vadd.f32 %v516, %v614
    %v616 = vpop.f32.mrb[0].mxu0
    %617 = vmatprep.mubr.bf16.mxu0 0
    %618 = vmatmul.mubr.bf16.gmra.mrb[0].mxu0 %v559
    %v619 = vpop.f32.mrb[0].mxu0
    %v620 = vadd.f32 %v521, %v619
    %v621 = vpop.f32.mrb[0].mxu0
    %v622 = vpop.f32.mrb[0].mxu0
    %v623 = vadd.f32 %v526, %v622
    %v624 = vpop.f32.mrb[0].mxu0
    %625 = vdwg.mxu0
    %v626 = vmax.f32 %v596, 0.0
    %v627 = vmax.f32 %v599, 0.0
    %v628 = vmax.f32 %v604, 0.0
    %v629 = vmax.f32 %v607, 0.0
    %v630 = vmax.f32 %v612, 0.0
    %v631 = vmax.f32 %v615, 0.0
    %v632 = vmax.f32 %v620, 0.0
    %v633 = vmax.f32 %v623, 0.0
    %v634 = vld [vmem:[%s5] sm:$0xf]
    %v635 = vld [vmem:[%s5 + $0x4] sm:$0xf]
    %v636 = vld [vmem:[%s5 + $0x8] sm:$0xf]
    %v637 = vld [vmem:[%s5 + $0xc] sm:$0xf]
    %v638 = vld [vmem:[%s5 + $0x10] sm:$0xf]
    %v639 = vld [vmem:[%s5 + $0x14] sm:$0xf]
    %v640 = vld [vmem:[%s5 + $0x18] sm:$0xf]
    %v641 = vld [vmem:[%s5 + $0x1c] sm:$0xf]
    %v642 = vpack.c.bf16 %v627, %v626
    %v643 = vpack.c.bf16 %v629, %v628
    %v644 = vpack.c.bf16 %v631, %v630
    %v645 = vpack.c.bf16 %v633, %v632
    %647 = vset.pattern.permute.xlu0 0
    %648 = vperm.xlu0 %647, %v55
    %v649 = vpop.permute.xlu0 %648
    %652 = vset.pattern.permute.xlu0 0
    %653 = vperm.xlu0 %652, %v56
    %v654 = vpop.permute.xlu0 %653
    %657 = vset.pattern.permute.xlu0 0
    %658 = vperm.xlu0 %657, %v57
    %v659 = vpop.permute.xlu0 %658
    %662 = vset.pattern.permute.xlu0 0
    %663 = vperm.xlu0 %662, %v58
    %v664 = vpop.permute.xlu0 %663
    %667 = vset.pattern.permute.xlu0 0
    %668 = vperm.xlu0 %667, %v59
    %v669 = vpop.permute.xlu0 %668
    %672 = vset.pattern.permute.xlu0 0
    %673 = vperm.xlu0 %672, %v60
    %v674 = vpop.permute.xlu0 %673
    %677 = vset.pattern.permute.xlu0 0
    %678 = vperm.xlu0 %677, %v61
    %v679 = vpop.permute.xlu0 %678
    %682 = vset.pattern.permute.xlu0 0
    %683 = vperm.xlu0 %682, %v62
    %v684 = vpop.permute.xlu0 %683
    %v694 = vunpack.c.l.b16 %v634
    %v695 = vunpack.c.l.b16 %v635
    %v696 = vunpack.c.l.b16 %v636
    %v697 = vunpack.c.l.b16 %v637
    %v698 = vunpack.c.l.b16 %v638
    %v699 = vunpack.c.l.b16 %v639
    %v700 = vunpack.c.l.b16 %v640
    %v701 = vunpack.c.l.b16 %v641
    %v702 = vpack.c.b16 %v695, %v694
    %v703 = vpack.c.b16 %v697, %v696
    %v704 = vpack.c.b16 %v699, %v698
    %v705 = vpack.c.b16 %v701, %v700
    %vm706 = vcmask 523264
    %v708 = vsel %vm706, %v702, 0
    %v711 = vsel %vm706, %v703, 0
    %v714 = vsel %vm706, %v704, 0
    %v717 = vsel %vm706, %v705, 0
    %719 = vmatprep.subr.bf16.mxu0 0
    %720 = vmatpush1.bf16.msra.mxu0 %v642
    %721 = vmatprep.subr.bf16.mxu0 0
    %722 = vmatpush1.bf16.msra.mxu0 %v643
    %723 = vmatprep.subr.bf16.mxu0 0
    %724 = vmatpush1.bf16.msra.mxu0 %v644
    %725 = vmatprep.subr.bf16.mxu0 0
    %726 = vmatpush1.bf16.msra.mxu0 %v645
    %727 = vmatprep.subr.bf16.mxu0 0
    %728 = vmatpush1.bf16.msra.mxu0 0
    %729 = vmatprep.subr.bf16.mxu0 0
    %730 = vmatpush1.bf16.msra.mxu0 0
    %731 = vmatprep.subr.bf16.mxu0 0
    %732 = vmatpush1.bf16.msra.mxu0 0
    %733 = vmatprep.subr.bf16.mxu0 0
    %734 = vmatpush1.bf16.msra.mxu0 0
    %735 = vmatprep.subr.bf16.mxu0 0
    %736 = vmatpush1.bf16.msra.mxu0 0
    %737 = vmatprep.subr.bf16.mxu0 0
    %738 = vmatpush1.bf16.msra.mxu0 0
    %739 = vmatprep.subr.bf16.mxu0 0
    %740 = vmatpush1.bf16.msra.mxu0 0
    %741 = vmatprep.subr.bf16.mxu0 0
    %742 = vmatpush1.bf16.msra.mxu0 0
    %743 = vmatprep.subr.bf16.mxu0 0
    %744 = vmatpush1.bf16.msra.mxu0 0
    %745 = vmatprep.subr.bf16.mxu0 0
    %746 = vmatpush1.bf16.msra.mxu0 0
    %747 = vmatprep.subr.bf16.mxu0 0
    %748 = vmatpush1.bf16.msra.mxu0 0
    %749 = vmatprep.subr.bf16.mxu0 0
    %750 = vmatpush1.bf16.msra.mxu0 0
    %751 = vmatprep.mubr.bf16.mxu0 0
    %752 = vmatmul.mubr.bf16.gmra.mrb[0].mxu0 %v708
    %v753 = vpop.f32.mrb[0].mxu0
    %v754 = vadd.f32 %v649, %v753
    %v755 = vpop.f32.mrb[0].mxu0
    %v756 = vpop.f32.mrb[0].mxu0
    %v757 = vadd.f32 %v654, %v756
    %v758 = vpop.f32.mrb[0].mxu0
    %759 = vmatprep.mubr.bf16.mxu0 0
    %760 = vmatmul.mubr.bf16.gmra.mrb[0].mxu0 %v711
    %v761 = vpop.f32.mrb[0].mxu0
    %v762 = vadd.f32 %v659, %v761
    %v763 = vpop.f32.mrb[0].mxu0
    %v764 = vpop.f32.mrb[0].mxu0
    %v765 = vadd.f32 %v664, %v764
    %v766 = vpop.f32.mrb[0].mxu0
    %767 = vmatprep.mubr.bf16.mxu0 0
    %768 = vmatmul.mubr.bf16.gmra.mrb[0].mxu0 %v714
    %v769 = vpop.f32.mrb[0].mxu0
    %v770 = vadd.f32 %v669, %v769
    %v771 = vpop.f32.mrb[0].mxu0
    %v772 = vpop.f32.mrb[0].mxu0
    %v773 = vadd.f32 %v674, %v772
    %v774 = vpop.f32.mrb[0].mxu0
    %775 = vmatprep.mubr.bf16.mxu0 0
    %776 = vmatmul.mubr.bf16.gmra.mrb[0].mxu0 %v717
    %v777 = vpop.f32.mrb[0].mxu0
    %v778 = vadd.f32 %v679, %v777
    %v779 = vpop.f32.mrb[0].mxu0
    %v780 = vpop.f32.mrb[0].mxu0
    %v781 = vadd.f32 %v684, %v780
    %v782 = vpop.f32.mrb[0].mxu0
    %783 = vdwg.mxu0
    %v784 = vmax.f32 %v754, 0.0
    %v785 = vmax.f32 %v757, 0.0
    %v786 = vmax.f32 %v762, 0.0
    %v787 = vmax.f32 %v765, 0.0
    %v788 = vmax.f32 %v770, 0.0
    %v789 = vmax.f32 %v773, 0.0
    %v790 = vmax.f32 %v778, 0.0
    %v791 = vmax.f32 %v781, 0.0
    %v792 = vld [vmem:[%s6] sm:$0xff]
    %v793 = vld [vmem:[%s6 + $0x8] sm:$0xff]
    %v794 = vld [vmem:[%s6 + $0x10] sm:$0xff]
    %v795 = vld [vmem:[%s6 + $0x18] sm:$0xff]
    %v796 = vld [vmem:[%s6 + $0x20] sm:$0xff]
    %v797 = vld [vmem:[%s6 + $0x28] sm:$0xff]
    %v798 = vld [vmem:[%s6 + $0x30] sm:$0xff]
    %v799 = vld [vmem:[%s6 + $0x38] sm:$0xff]
    %801 = vset.pattern.permute.xlu0 0
    %802 = vperm.xlu0 %801, %v792
    %v803 = vpop.permute.xlu0 %802
    %806 = vset.pattern.permute.xlu0 0
    %807 = vperm.xlu0 %806, %v793
    %v808 = vpop.permute.xlu0 %807
    %811 = vset.pattern.permute.xlu0 0
    %812 = vperm.xlu0 %811, %v794
    %v813 = vpop.permute.xlu0 %812
    %816 = vset.pattern.permute.xlu0 0
    %817 = vperm.xlu0 %816, %v795
    %v818 = vpop.permute.xlu0 %817
    %821 = vset.pattern.permute.xlu0 0
    %822 = vperm.xlu0 %821, %v796
    %v823 = vpop.permute.xlu0 %822
    %826 = vset.pattern.permute.xlu0 0
    %827 = vperm.xlu0 %826, %v797
    %v828 = vpop.permute.xlu0 %827
    %831 = vset.pattern.permute.xlu0 0
    %832 = vperm.xlu0 %831, %v798
    %v833 = vpop.permute.xlu0 %832
    %836 = vset.pattern.permute.xlu0 0
    %837 = vperm.xlu0 %836, %v799
    %v838 = vpop.permute.xlu0 %837
    %v840 = vmul.f32 %v784, %v803
    %v841 = vmul.f32 %v785, %v808
    %v842 = vmul.f32 %v786, %v813
    %v843 = vmul.f32 %v787, %v818
    %v844 = vmul.f32 %v788, %v823
    %v845 = vmul.f32 %v789, %v828
    %v846 = vmul.f32 %v790, %v833
    %v847 = vmul.f32 %v791, %v838
    %v848 = vadd.f32 %v840, %v841
    %v849 = vadd.f32 %v848, %v842
    %v850 = vadd.f32 %v849, %v843
    %v851 = vadd.f32 %v850, %v844
    %v852 = vadd.f32 %v851, %v845
    %v853 = vadd.f32 %v852, %v846
    %v854 = vadd.f32 %v853, %v847
    %v855 = vrot.slane %v854, 4
    %v856 = vadd.f32 %v854, %v855
    %v857 = vrot.slane %v856, 2
    %v858 = vadd.f32 %v856, %v857
    %v859 = vrot.slane %v858, 1
    %v860 = vadd.f32 %v858, %v859
    %861 = vset.pattern.permute.xlu0 1
    %862 = vperm.xlu0 %861, %v792
    %v863 = vpop.permute.xlu0 %862
    %865 = vset.pattern.permute.xlu0 1
    %866 = vperm.xlu0 %865, %v793
    %v867 = vpop.permute.xlu0 %866
    %869 = vset.pattern.permute.xlu0 1
    %870 = vperm.xlu0 %869, %v794
    %v871 = vpop.permute.xlu0 %870
    %873 = vset.pattern.permute.xlu0 1
    %874 = vperm.xlu0 %873, %v795
    %v875 = vpop.permute.xlu0 %874
    %877 = vset.pattern.permute.xlu0 1
    %878 = vperm.xlu0 %877, %v796
    %v879 = vpop.permute.xlu0 %878
    %881 = vset.pattern.permute.xlu0 1
    %882 = vperm.xlu0 %881, %v797
    %v883 = vpop.permute.xlu0 %882
    %885 = vset.pattern.permute.xlu0 1
    %886 = vperm.xlu0 %885, %v798
    %v887 = vpop.permute.xlu0 %886
    %889 = vset.pattern.permute.xlu0 1
    %890 = vperm.xlu0 %889, %v799
    %v891 = vpop.permute.xlu0 %890
    %v893 = vmul.f32 %v784, %v863
    %v894 = vmul.f32 %v785, %v867
    %v895 = vmul.f32 %v786, %v871
    %v896 = vmul.f32 %v787, %v875
    %v897 = vmul.f32 %v788, %v879
    %v898 = vmul.f32 %v789, %v883
    %v899 = vmul.f32 %v790, %v887
    %v900 = vmul.f32 %v791, %v891
    %v901 = vadd.f32 %v893, %v894
    %v902 = vadd.f32 %v901, %v895
    %v903 = vadd.f32 %v902, %v896
    %v904 = vadd.f32 %v903, %v897
    %v905 = vadd.f32 %v904, %v898
    %v906 = vadd.f32 %v905, %v899
    %v907 = vadd.f32 %v906, %v900
    %v908 = vrot.slane %v907, 4
    %v909 = vadd.f32 %v907, %v908
    %v910 = vrot.slane %v909, 2
    %v911 = vadd.f32 %v909, %v910
    %v912 = vrot.slane %v911, 1
    %v913 = vadd.f32 %v911, %v912
    %915 = vset.pattern.permute.xlu0 0
    %916 = vperm.xlu0 %915, %v63
    %v917 = vpop.permute.xlu0 %916
    %v919 = vadd.f32 %v860, %v917
    %920 = vst [vmem:[#allocation2] sm:$0x1] %v919
    %v921 = vadd.f32 %v913, %v917
    %922 = vst [vmem:[#allocation2] sm:$0x2] %v921
    // Predicated region
    $region34: #{tpu_custom_call.1} parent=1 // pred_check
      _
    $region35: #{tpu_custom_call.1} parent=1 // pred_check_branch
      %924 = sbr.rel (0) target = $region37
    $region36: #{tpu_custom_call.1} parent=1 // pred_region
      %s926 = ssub.s32 32, 32
      %927 = vsyncadd [#allocation3], %s926
      %s929 = sshll.u32 [#allocation2], 4
      %s930 = int_to_ptr.vmem [resolvable:$true] %s929
      %932 = dma.vmem_to_hbm [thread:$0]  %s930, 32, %s8, [#allocation3]
    $region37: #{tpu_custom_call.1} parent=1 // pred_fallthru
      _
    // Predicated region
    $region38: #{tpu_custom_call.1} parent=1 // pred_check
      _
    $region39: #{tpu_custom_call.1} parent=1 // pred_check_branch
      %934 = sbr.rel (0) target = $region41
    $region40: #{tpu_custom_call.1} parent=1 // pred_region
      %935 = dma.done [#allocation3], 32
    $region41: #{tpu_custom_call.1} parent=1 // pred_fallthru
      _
    %936 = vsyncpa [#allocation3], 1

</llo_original>
